<compile_context>
chip_gen: v7x
topology: tpu7x:2x2x1
jax: 0.10.0
libtpu: 0.0.40
codegen_flags: <defaults>
</compile_context>

<pallas_src>
import functools

import jax
import jax.numpy as jnp
from jax.experimental import pallas as pl
from jax.experimental.pallas import tpu as pltpu


# ---------------------------------------------------------------------------
# kernels
# ---------------------------------------------------------------------------
def _layernorm_kernel(x_ref, a_ref, b_ref, o_ref, *, eps, d_model):
    # x_ref: (TILE_ROWS, d_model) VMEM;  a_ref / b_ref: (1, d_model) VMEM
    x = x_ref[...].astype(jnp.float32)
    mean = jnp.mean(x, axis=-1, keepdims=True)
    diff = x - mean
    # torch.Tensor.std defaults to the unbiased estimator (divide by n-1).
    var = jnp.sum(diff * diff, axis=-1, keepdims=True) / float(d_model - 1)
    std = jnp.sqrt(var)
    y = a_ref[...].astype(jnp.float32) * diff / (std + eps) \
        + b_ref[...].astype(jnp.float32)
    o_ref[...] = y.astype(o_ref.dtype)


def _residual_add_kernel(x_ref, y_ref, o_ref):
    # eval mode: dropout is the identity -> plain residual add
    x = x_ref[...].astype(jnp.float32)
    y = y_ref[...].astype(jnp.float32)
    o_ref[...] = (x + y).astype(o_ref.dtype)


def _residual_dropout_kernel(x_ref, y_ref, u_ref, o_ref, *, p):
    # x_ref, y_ref, o_ref: (TILE_ROWS, d_model); u_ref: uniform[0,1) f32 tile.
    # Inverted dropout: keep with prob (1-p), scale kept values by 1/(1-p).
    x = x_ref[...].astype(jnp.float32)
    y = y_ref[...].astype(jnp.float32)
    keep = u_ref[...] >= jnp.float32(p)
    out = x + jnp.where(keep, y * (1.0 / (1.0 - p)), 0.0)
    o_ref[...] = out.astype(o_ref.dtype)


# ---------------------------------------------------------------------------
# wrappers
# ---------------------------------------------------------------------------
def _pick_tile_rows(n_rows, tile_rows):
    if n_rows <= tile_rows:
        return n_rows                       # single block covering full extent
    return max(8, (tile_rows // 8) * 8)     # sublane-aligned row tile


def _vmem_limit(tile_rows, d_model, itemsize, n_tiled_arrays):
    # double-buffered tiles + 1 MiB headroom, clamped below v7x's 64 MiB VMEM
    need = 2 * n_tiled_arrays * tile_rows * d_model * max(itemsize, 4) + (1 << 20)
    return int(min(max(need, 16 << 20), 60 << 20))


def layernorm_forward(x, a_2, b_2, *, eps=1e-6, tile_rows=256):
    """a_2 * (x - mean) / (std + eps) + b_2, reduction over the last dim."""
    batch, seq, d_model = x.shape
    n_rows = batch * seq
    x2d = x.reshape(n_rows, d_model)
    tr = _pick_tile_rows(n_rows, tile_rows)
    grid = (pl.cdiv(n_rows, tr),)

    out2d = pl.pallas_call(
        functools.partial(_layernorm_kernel, eps=float(eps), d_model=d_model),
        out_shape=jax.ShapeDtypeStruct((n_rows, d_model), x.dtype),
        grid_spec=pltpu.PrefetchScalarGridSpec(
            num_scalar_prefetch=0,
            grid=grid,
            in_specs=[
                pl.BlockSpec((tr, d_model), lambda i: (i, 0)),
                pl.BlockSpec((1, d_model), lambda i: (0, 0)),
                pl.BlockSpec((1, d_model), lambda i: (0, 0)),
            ],
            out_specs=pl.BlockSpec((tr, d_model), lambda i: (i, 0)),
        ),
        compiler_params=pltpu.CompilerParams(
            dimension_semantics=("parallel",),
            vmem_limit_bytes=_vmem_limit(tr, d_model, x.dtype.itemsize, 2),
        ),
        cost_estimate=pl.CostEstimate(
            flops=8 * n_rows * d_model,
            transcendentals=n_rows,
            bytes_accessed=2 * n_rows * d_model * x.dtype.itemsize,
        ),
    )(x2d, a_2.reshape(1, d_model), b_2.reshape(1, d_model))
    return out2d.reshape(batch, seq, d_model)


def residual_dropout_forward(x, y, *, dropout_p=0.1, deterministic=True,
                             rng_key=None, tile_rows=256):
    """x + dropout(y) (inverted dropout; identity in eval mode)."""
    batch, seq, d_model = x.shape
    n_rows = batch * seq
    x2d = x.reshape(n_rows, d_model)
    y2d = y.reshape(n_rows, d_model)
    tr = _pick_tile_rows(n_rows, tile_rows)
    grid = (pl.cdiv(n_rows, tr),)
    use_dropout = (not deterministic) and dropout_p > 0.0

    if not use_dropout:
        out2d = pl.pallas_call(
            _residual_add_kernel,
            out_shape=jax.ShapeDtypeStruct((n_rows, d_model), x.dtype),
            grid_spec=pltpu.PrefetchScalarGridSpec(
                num_scalar_prefetch=0,
                grid=grid,
                in_specs=[
                    pl.BlockSpec((tr, d_model), lambda i: (i, 0)),
                    pl.BlockSpec((tr, d_model), lambda i: (i, 0)),
                ],
                out_specs=pl.BlockSpec((tr, d_model), lambda i: (i, 0)),
            ),
            compiler_params=pltpu.CompilerParams(
                dimension_semantics=("parallel",),
                vmem_limit_bytes=_vmem_limit(tr, d_model, x.dtype.itemsize, 3),
            ),
            cost_estimate=pl.CostEstimate(
                flops=n_rows * d_model,
                transcendentals=0,
                bytes_accessed=3 * n_rows * d_model * x.dtype.itemsize,
            ),
        )(x2d, y2d)
        return out2d.reshape(batch, seq, d_model)

    # TODO(synk): dropout randomness is generated with jax.random in the
    # wrapper (in-kernel pltpu.prng_* has no lowering in the CPU-interpret
    # path); the mask select/scale + residual add stays fused in-kernel.
    if rng_key is None:
        rng_key = jax.random.PRNGKey(0)
    u = jax.random.uniform(rng_key, (n_rows, d_model), jnp.float32)

    out2d = pl.pallas_call(
        functools.partial(_residual_dropout_kernel, p=float(dropout_p)),
        out_shape=jax.ShapeDtypeStruct((n_rows, d_model), x.dtype),
        grid_spec=pltpu.PrefetchScalarGridSpec(
            num_scalar_prefetch=0,
            grid=grid,
            in_specs=[
                pl.BlockSpec((tr, d_model), lambda i: (i, 0)),
                pl.BlockSpec((tr, d_model), lambda i: (i, 0)),
                pl.BlockSpec((tr, d_model), lambda i: (i, 0)),
            ],
            out_specs=pl.BlockSpec((tr, d_model), lambda i: (i, 0)),
        ),
        compiler_params=pltpu.CompilerParams(
            dimension_semantics=("parallel",),
            vmem_limit_bytes=_vmem_limit(tr, d_model, x.dtype.itemsize, 4),
        ),
        cost_estimate=pl.CostEstimate(
            flops=4 * n_rows * d_model,
            transcendentals=0,
            bytes_accessed=4 * n_rows * d_model * x.dtype.itemsize,
        ),
    )(x2d, y2d, u)
    return out2d.reshape(batch, seq, d_model)


def sublayer_connection_forward(x, a_2, b_2, sublayer, *, dropout_p=0.1,
                                deterministic=True, rng_key=None,
                                eps=1e-6, tile_rows=256):
    """SublayerConnection.forward: x + dropout(sublayer(LayerNorm(x)))."""
    normed = layernorm_forward(x, a_2, b_2, eps=eps, tile_rows=tile_rows)
    # TODO(synk): `sublayer` is an arbitrary user callable (e.g. attention /
    # feed-forward); it is applied as plain JAX between the two Pallas kernels.
    y = sublayer(normed)
    return residual_dropout_forward(
        x, y, dropout_p=dropout_p, deterministic=deterministic,
        rng_key=rng_key, tile_rows=tile_rows)


# ---------------------------------------------------------------------------
# self-test
# ---------------------------------------------------------------------------
if __name__ == "__main__":
    batch, seq, d_model = 2, 8, 32
    eps = 1e-6
    dropout_p = 0.1

    key = jax.random.PRNGKey(0)
    kx, ka, kb, kw, kwb, kdrop = jax.random.split(key, 6)

    x = jax.random.normal(kx, (batch, seq, d_model), jnp.float32)
    # LayerNorm affine params (torch inits ones/zeros; randomized here to
    # exercise the affine path — the formula is identical)
    a_2 = 1.0 + 0.1 * jax.random.normal(ka, (d_model,), jnp.float32)
    b_2 = 0.1 * jax.random.normal(kb, (d_model,), jnp.float32)

    # example "sublayer": a position-wise linear map, standing in for the
    # arbitrary callable passed to SublayerConnection.forward
    bound = 1.0 / (d_model ** 0.5)
    w = jax.random.uniform(kw, (d_model, d_model), jnp.float32, -bound, bound)
    wb = jax.random.uniform(kwb, (d_model,), jnp.float32, -bound, bound)
    sublayer = lambda h: jnp.einsum("bsd,de->bse", h, w) + wb

    # pure-JAX references -----------------------------------------------------
    mean = jnp.mean(x, axis=-1, keepdims=True)
    std = jnp.std(x, axis=-1, ddof=1, keepdims=True)   # torch: unbiased std
    normed_ref = a_2 * (x - mean) / (std + eps) + b_2
    y_ref = sublayer(normed_ref)

    # --- eval mode (dropout = identity): exact check vs pure-JAX reference ---
    out = sublayer_connection_forward(
        x, a_2, b_2, sublayer, dropout_p=dropout_p, deterministic=True, eps=eps)
    out = jax.block_until_ready(out)

    ref = x + y_ref
    assert out.shape == (batch, seq, d_model)
    assert jnp.allclose(out, ref, atol=1e-5, rtol=1e-5), \
        float(jnp.max(jnp.abs(out - ref)))

    # --- training mode: exercise the fused dropout path (exact check, since
    # the mask is reproducible from the same key) -----------------------------
    out_train = sublayer_connection_forward(
        x, a_2, b_2, sublayer, dropout_p=dropout_p, deterministic=False,
        rng_key=kdrop, eps=eps)
    out_train = jax.block_until_ready(out_train)

    u_ref = jax.random.uniform(kdrop, (batch * seq, d_model), jnp.float32)
    u_ref = u_ref.reshape(batch, seq, d_model)
    ref_train = x + jnp.where(u_ref >= dropout_p,
                              y_ref * (1.0 / (1.0 - dropout_p)), 0.0)
    assert out_train.shape == (batch, seq, d_model)
    assert jnp.allclose(out_train, ref_train, atol=1e-5, rtol=1e-5), \
        float(jnp.max(jnp.abs(out_train - ref_train)))

    print("KERNEL_OK")
</pallas_src>

<mosaic_0001>
module attributes {stable_mosaic.version = 11 : i64} {
  func.func @_layernorm_kernel(%arg0: i32, %arg1: memref<16x32xf32, #tpu.memory_space<vmem>>, %arg2: memref<1x32xf32, #tpu.memory_space<vmem>>, %arg3: memref<1x32xf32, #tpu.memory_space<vmem>>, %arg4: memref<16x32xf32, #tpu.memory_space<vmem>>) attributes {dimension_semantics = [#tpu.dimension_semantics<parallel>], iteration_bounds = array<i64: 1>, scalar_prefetch = 0 : i64, scratch_operands = 0 : i64, tpu.core_type = #tpu.core_type<tc>, window_params = [{transform_indices = @transform_0, window_bounds = array<i64: 16, 32>}, {pipeline_mode = #tpu.pipeline_mode<synchronous>, transform_indices = @transform_1, window_bounds = array<i64: 1, 32>}, {pipeline_mode = #tpu.pipeline_mode<synchronous>, transform_indices = @transform_2, window_bounds = array<i64: 1, 32>}, {transform_indices = @transform_3, window_bounds = array<i64: 16, 32>}]} {
    %c0 = arith.constant 0 : index
    %c0_0 = arith.constant 0 : index
    %0 = vector.load %arg1[%c0, %c0_0] : memref<16x32xf32, #tpu.memory_space<vmem>>, vector<16x32xf32>
    %cst = arith.constant dense<0.000000e+00> : vector<16xf32>
    %1 = vector.multi_reduction <add>, %0, %cst [1] : vector<16x32xf32> to vector<16xf32>
    %2 = vector.shape_cast %1 : vector<16xf32> to vector<16x1xf32>
    %cst_1 = arith.constant 3.200000e+01 : f32
    %3 = vector.broadcast %cst_1 : f32 to vector<16x1xf32>
    %4 = arith.divf %2, %3 : vector<16x1xf32>
    %5 = vector.broadcast %4 : vector<16x1xf32> to vector<16x32xf32>
    %6 = arith.subf %0, %5 : vector<16x32xf32>
    %7 = arith.mulf %6, %6 : vector<16x32xf32>
    %cst_2 = arith.constant dense<0.000000e+00> : vector<16xf32>
    %8 = vector.multi_reduction <add>, %7, %cst_2 [1] : vector<16x32xf32> to vector<16xf32>
    %9 = vector.shape_cast %8 : vector<16xf32> to vector<16x1xf32>
    %cst_3 = arith.constant 3.100000e+01 : f32
    %10 = vector.broadcast %cst_3 : f32 to vector<16x1xf32>
    %11 = arith.divf %9, %10 : vector<16x1xf32>
    %12 = math.sqrt %11 : vector<16x1xf32>
    %c0_4 = arith.constant 0 : index
    %c0_5 = arith.constant 0 : index
    %13 = vector.load %arg2[%c0_4, %c0_5] : memref<1x32xf32, #tpu.memory_space<vmem>>, vector<1x32xf32>
    %14 = vector.broadcast %13 : vector<1x32xf32> to vector<16x32xf32>
    %15 = arith.mulf %14, %6 : vector<16x32xf32>
    %cst_6 = arith.constant 9.99999997E-7 : f32
    %16 = vector.broadcast %cst_6 : f32 to vector<16x1xf32>
    %17 = arith.addf %12, %16 : vector<16x1xf32>
    %18 = vector.broadcast %17 : vector<16x1xf32> to vector<16x32xf32>
    %19 = arith.divf %15, %18 : vector<16x32xf32>
    %c0_7 = arith.constant 0 : index
    %c0_8 = arith.constant 0 : index
    %20 = vector.load %arg3[%c0_7, %c0_8] : memref<1x32xf32, #tpu.memory_space<vmem>>, vector<1x32xf32>
    %21 = vector.broadcast %20 : vector<1x32xf32> to vector<16x32xf32>
    %22 = arith.addf %19, %21 : vector<16x32xf32>
    %c0_9 = arith.constant 0 : index
    %c0_10 = arith.constant 0 : index
    %23 = vector.load %arg4[%c0_9, %c0_10] : memref<16x32xf32, #tpu.memory_space<vmem>>, vector<16x32xf32>
    tpu.vector_store %arg4[%c0_9, %c0_10], %22 {strides = array<i32>} : memref<16x32xf32, #tpu.memory_space<vmem>>, vector<16x32xf32>,
    return
  }
  func.func @transform_0(%arg0: i32) -> (i32, i32) {
    %c0_i32 = arith.constant 0 : i32
    %c0_i32_0 = arith.constant 0 : i32
    return %arg0, %c0_i32 : i32, i32
  }
  func.func @transform_1(%arg0: i32) -> (i32, i32) {
    %c0_i32 = arith.constant 0 : i32
    %c0_i32_0 = arith.constant 0 : i32
    %c0_i32_1 = arith.constant 0 : i32
    return %c0_i32, %c0_i32_0 : i32, i32
  }
  func.func @transform_2(%arg0: i32) -> (i32, i32) {
    %c0_i32 = arith.constant 0 : i32
    %c0_i32_0 = arith.constant 0 : i32
    %c0_i32_1 = arith.constant 0 : i32
    return %c0_i32, %c0_i32_0 : i32, i32
  }
  func.func @transform_3(%arg0: i32) -> (i32, i32) {
    %c0_i32 = arith.constant 0 : i32
    %c0_i32_0 = arith.constant 0 : i32
    return %arg0, %c0_i32 : i32, i32
  }
}

</mosaic_0001>

<llo_original>
// kernel: tpu_custom_call.1
$region0: #{tpu_custom_call.1}
  #allocation0 [shape = 'u32[]', space=smem, size = 0x4, offset = 0x4, fixed_abs, tag = 'smem constant byte address 0x4 - core index']
  #allocation1 [shape = 'u32[144,128]{1,0:T(1,128)}', space=vmem, size = 0x12000, scoped, tag = 'internal scratch']
  %s0 = inlined_call_operand.hbm [shape: f32[16,32], index: 0, kind: input, shape index: {}]
  %s1 = inlined_call_operand.vmem [shape: f32[1,32], index: 1, kind: input, shape index: {}]
  %s2 = inlined_call_operand.vmem [shape: f32[1,32], index: 2, kind: input, shape index: {}]
  %s3 = inlined_call_operand.hbm [shape: f32[16,32], index: 3, kind: output, shape index: {}]
  %s4 = sld [smem:[#allocation0]]
  $region26: #{tpu_custom_call.1} parent=0
    _
  %s6 = ssub.s32 1, %s4
  %s7 = scalar_select 0, %s6, %s4
  $region1: #{tpu_custom_call.1} parent=0
    #allocation2 [shape = 'u8[8192]{0}', space=vmem, size = 0x2000, scoped, tag = 'input window, operand 0, single buffered']
    #allocation3 [shape = 's32[1]{0}', space=sflag, size = 0x4, scoped, tag = 'scoped memory for tpu_custom_call.1']
    #allocation4 [shape = 's32[1]{0}', space=sflag, size = 0x4, scoped, tag = 'scoped memory for tpu_custom_call.1']
    #allocation5 [shape = 'u8[8192]{0}', space=vmem, size = 0x2000, scoped, tag = 'output window, operand 0, single buffered']
    %8 = vsyncpa [#allocation3], 0
    %9 = vsyncpa [#allocation4], 0
    // Predicated region
    $region2: #{tpu_custom_call.1} parent=1 // pred_check
      _
    $region3: #{tpu_custom_call.1} parent=1 // pred_check_branch
      %11 = sbr.rel (0) target = $region5
    $region4: #{tpu_custom_call.1} parent=1 // pred_region
      %s13 = ssub.s32 256, 256
      %14 = vsyncadd [#allocation3], %s13
      %s15 = sshll.u32 [#allocation2], 4
      %s16 = int_to_ptr.vmem [resolvable:$true] %s15
      %21 = dma.hbm_to_vmem [thread:$0]  %s0, 256, %s16, [#allocation3], 128, 128, 8
    $region5: #{tpu_custom_call.1} parent=1 // pred_fallthru
      _
    // Predicated region
    $region6: #{tpu_custom_call.1} parent=1 // pred_check
      _
    $region7: #{tpu_custom_call.1} parent=1 // pred_check_branch
      %23 = sbr.rel (0) target = $region9
    $region8: #{tpu_custom_call.1} parent=1 // pred_region
      _
    $region9: #{tpu_custom_call.1} parent=1 // pred_fallthru
      _
    // Predicated region
    $region10: #{tpu_custom_call.1} parent=1 // pred_check
      _
    $region11: #{tpu_custom_call.1} parent=1 // pred_check_branch
      %25 = sbr.rel (0) target = $region13
    $region12: #{tpu_custom_call.1} parent=1 // pred_region
      _
    $region13: #{tpu_custom_call.1} parent=1 // pred_fallthru
      _
    // Predicated region
    $region14: #{tpu_custom_call.1} parent=1 // pred_check
      _
    $region15: #{tpu_custom_call.1} parent=1 // pred_check_branch
      %27 = sbr.rel (0) target = $region17
    $region16: #{tpu_custom_call.1} parent=1 // pred_region
      %28 = dma.done [#allocation3], 256
    $region17: #{tpu_custom_call.1} parent=1 // pred_fallthru
      _
    %v29 = vld [vmem:[#allocation2] sm:$0xff]
    %v30 = vld [vmem:[#allocation2 + $0x8] sm:$0xff]
    %vm31 = vcmask 261120
    %v32 = vsel %vm31, %v29, 0.0
    %33 = vadd.xlane.f32.xlu0 %v32
    %v34 = vpop.xlane.xlu0 %33
    %v35 = vsel %vm31, %v30, 0.0
    %36 = vadd.xlane.f32.xlu0 %v35
    %v37 = vpop.xlane.xlu0 %36
    %v38 = vrcp.pop 32.0
    %v39 = vmul.f32 %v34, %v38
    %v40 = vmul.f32 %v37, %v38
    %v41 = vsub.f32 %v29, %v39
    %v42 = vsub.f32 %v30, %v40
    %v43 = vmul.f32 %v41, %v41
    %v44 = vmul.f32 %v42, %v42
    %v45 = vsel %vm31, %v43, 0.0
    %46 = vadd.xlane.f32.xlu0 %v45
    %v47 = vpop.xlane.xlu0 %46
    %v48 = vsel %vm31, %v44, 0.0
    %49 = vadd.xlane.f32.xlu0 %v48
    %v50 = vpop.xlane.xlu0 %49
    %v51 = vrcp.pop 31.0
    %v52 = vmul.f32 %v47, %v51
    %v53 = vmul.f32 %v50, %v51
    %v54 = vrsqrt.pop %v52
    %v55 = vmul.f32 %v52, %v54
    %vm56 = vcmp.eq.f32.partialorder %v52, inf
    %v57 = vsel %vm56, %v52, %v55
    %vm58 = vcmp.eq.f32.partialorder %v52, 0.0
    %v59 = vand.u32 %v52, 2147483648
    %v60 = vsel %vm58, %v59, %v57
    %v61 = vrsqrt.pop %v53
    %v62 = vmul.f32 %v53, %v61
    %vm63 = vcmp.eq.f32.partialorder %v53, inf
    %v64 = vsel %vm63, %v53, %v62
    %vm65 = vcmp.eq.f32.partialorder %v53, 0.0
    %v66 = vand.u32 %v53, 2147483648
    %v67 = vsel %vm65, %v66, %v64
    %v68 = vld [vmem:[%s1] sm:$0x1]
    %v70 = vlaneseq
    %v71 = vshrl.u32 %v70, 7
    %v72 = vsub.s32 0, %v71
    %v73 = vrot.slane %v68, %v72
    %v75 = vmul.f32 %v73, %v41
    %v76 = vmul.f32 %v73, %v42
    %v77 = vadd.f32 %v60, 1e-06
    %v78 = vadd.f32 %v67, 1e-06
    %v79 = vrcp.pop %v77
    %v80 = vmul.f32 %v75, %v79
    %v81 = vrcp.pop %v78
    %v82 = vmul.f32 %v76, %v81
    %v83 = vld [vmem:[%s2] sm:$0x1]
    %v85 = vlaneseq
    %v86 = vshrl.u32 %v85, 7
    %v87 = vsub.s32 0, %v86
    %v88 = vrot.slane %v83, %v87
    %v90 = vadd.f32 %v80, %v88
    %v91 = vadd.f32 %v82, %v88
    %92 = vst.msk [vmem:[#allocation5] sm:$0xff] %vm31, %v90
    %93 = vst.msk [vmem:[#allocation5 + $0x8] sm:$0xff] %vm31, %v91
    // Predicated region
    $region18: #{tpu_custom_call.1} parent=1 // pred_check
      _
    $region19: #{tpu_custom_call.1} parent=1 // pred_check_branch
      %95 = sbr.rel (0) target = $region21
    $region20: #{tpu_custom_call.1} parent=1 // pred_region
      %s97 = ssub.s32 256, 256
      %98 = vsyncadd [#allocation4], %s97
      %s99 = sshll.u32 [#allocation5], 4
      %s100 = int_to_ptr.vmem [resolvable:$true] %s99
      %105 = dma.vmem_to_hbm [thread:$0]  %s100, 256, %s3, [#allocation4], 128, 128, 8
    $region21: #{tpu_custom_call.1} parent=1 // pred_fallthru
      _
    // Predicated region
    $region22: #{tpu_custom_call.1} parent=1 // pred_check
      _
    $region23: #{tpu_custom_call.1} parent=1 // pred_check_branch
      %107 = sbr.rel (0) target = $region25
    $region24: #{tpu_custom_call.1} parent=1 // pred_region
      %108 = dma.done [#allocation4], 256
    $region25: #{tpu_custom_call.1} parent=1 // pred_fallthru
      _
    %109 = vsyncpa [#allocation3], 1
    %110 = vsyncpa [#allocation4], 1

</llo_original>
